<compile_context>
chip_gen: v7x
topology: tpu7x:2x2x1
jax: 0.10.0
libtpu: 0.0.40
codegen_flags: <defaults>
</compile_context>

<pallas_src>
import functools

import jax
import jax.numpy as jnp
from jax import lax
from jax.experimental import pallas as pl
from jax.experimental.pallas import tpu as pltpu

LANES = 128  # vreg lane width


def _tpu_generation():
    """Best-effort TPU generation from device_kind; 0 if unknown."""
    try:
        kind = jax.devices()[0].device_kind.lower()
    except Exception:
        return 0
    if "v7" in kind or "tpu7" in kind:
        return 7
    for g in (6, 5, 4, 3, 2):
        if f"v{g}" in kind:
            return g
    return 0


def _hloss_kernel(x_ref, o_ref, acc_ref, *, n_full_blocks, tail_rows,
                  compute_dtype):
    """x_ref: (tm, LANES) tile; o_ref: (1,1) SMEM partial; acc_ref: (sub,LANES) f32."""
    c = pl.program_id(0)          # core-split index
    i = pl.program_id(1)          # row-block index within this core's range
    bpc = pl.num_programs(1)      # blocks per core-split
    blk = c * bpc + i             # logical (unclamped) block index

    @pl.when(i == 0)
    def _init():
        acc_ref[...] = jnp.zeros_like(acc_ref)

    tm = x_ref.shape[0]
    sub = acc_ref.shape[0]

    def _term():
        # bf16-native on v6e/v7x (EUP/VPU relief), f32 upcast elsewhere.
        xv = x_ref[...].astype(compute_dtype)
        # Exact PyTorch semantics: x == 0 -> x * log(x) = NaN is preserved.
        return (xv * jnp.log(xv)).astype(jnp.float32)

    def _accumulate(term_f32):
        # Splitting only the major axis keeps every (8,128) tile intact, so
        # this lowers to pure vreg-wise VALU adds (no XLU / VMEM relayout).
        acc_ref[...] += jnp.sum(term_f32.reshape(tm // sub, sub, LANES), axis=0)

    # Fast path: interior full blocks -- no mask at all.
    @pl.when(blk < n_full_blocks)
    def _full_block():
        _accumulate(_term())

    # Slow path: the single partial last block (emitted only if one exists).
    # Clamped duplicate blocks (blk >= nblocks) skip compute entirely; the
    # where() (select, not multiply) discards NaN/Inf from garbage rows.
    if tail_rows:
        @pl.when(blk == n_full_blocks)
        def _partial_block():
            row = lax.broadcasted_iota(jnp.int32, (tm, LANES), 0)
            _accumulate(jnp.where(row < tail_rows, _term(), 0.0))

    @pl.when(i == bpc - 1)
    def _finalize():
        o_ref[0, 0] = -jnp.sum(acc_ref[...])


def hloss(x):
    """Pallas implementation of HLoss.forward: -(x * log(x)).sum() -> f32 scalar."""
    flat = x.reshape(-1)          # contiguous reshape: layout-free, no copy
    n = int(flat.shape[0])
    if n == 0:
        return jnp.float32(0.0)

    gen = _tpu_generation()
    itemsize = int(jnp.dtype(x.dtype).itemsize)

    # Unaligned tail (< 128 elements) handled in plain JAX: no padded HBM copy
    # of the whole input (the old concatenate materialized write-n + read-n).
    rows = n // LANES
    rem = n - rows * LANES
    tail_loss = jnp.float32(0.0)
    if rem:
        tailf = flat[rows * LANES:].astype(jnp.float32)
        tail_loss = -jnp.sum(tailf * jnp.log(tailf))
    if rows == 0:
        return tail_loss

    # Aligned prefix; when rem == 0 this is a pure reshape of x (zero copy).
    head = flat if rem == 0 else flat[: rows * LANES]
    x2d = head.reshape(rows, LANES)

    # Per-generation knobs (perf review): bigger blocks + bf16-native log on
    # v6e/v7x, 2-TensorCore split (CORE_PARALLEL) on v7x only, conservative
    # defaults on v5e / unknown chips.
    bf16_native = (x.dtype == jnp.bfloat16) and gen >= 6
    compute_dtype = jnp.bfloat16 if bf16_native else jnp.float32
    block_bytes = (8 << 20) if gen >= 6 else (4 << 20)
    vmem_limit = (32 << 20) if gen >= 6 else None
    ncores = 2 if gen >= 7 else 1

    # Row-tile: ~block_bytes per block, multiple of 8 sublanes, never taller
    # than the slab (a partial last block is handled by the masked slow path).
    tm_target = max(8, (block_bytes // (LANES * itemsize)) // 8 * 8)
    tm = min(tm_target, (rows // 8) * 8) if rows >= 8 else rows
    sub = 8 if tm % 8 == 0 else 1   # accumulator sublane height

    n_full_blocks = rows // tm
    tail_rows = rows - n_full_blocks * tm           # rows in the partial block
    nblocks = n_full_blocks + (1 if tail_rows else 0)
    bpc = pl.cdiv(nblocks, ncores)                  # blocks per core-split
    grid = (ncores, bpc)

    def in_index(c, i):
        # Clamp so the DMA of logically out-of-range (duplicate) blocks never
        # walks past the slab; their compute is skipped inside the kernel.
        return (jnp.minimum(c * bpc + i, nblocks - 1), 0)

    kernel = functools.partial(
        _hloss_kernel,
        n_full_blocks=n_full_blocks,
        tail_rows=tail_rows,
        compute_dtype=compute_dtype,
    )

    if ncores == 2:
        # v7x: only CORE_PARALLEL actually shards a grid axis across the two
        # TensorCores (plain "parallel" does not change codegen).
        dim_sems = (pltpu.CORE_PARALLEL, pltpu.ARBITRARY)
    else:
        dim_sems = (pltpu.ARBITRARY, pltpu.ARBITRARY)

    out = pl.pallas_call(
        kernel,
        out_shape=jax.ShapeDtypeStruct((ncores, 1), jnp.float32),
        grid_spec=pltpu.PrefetchScalarGridSpec(
            num_scalar_prefetch=0,
            grid=grid,
            in_specs=[pl.BlockSpec((tm, LANES), in_index)],
            out_specs=pl.BlockSpec((1, 1), lambda c, i: (c, 0),
                                   memory_space=pltpu.SMEM),
            scratch_shapes=[pltpu.VMEM((sub, LANES), jnp.float32)],
        ),
        compiler_params=pltpu.CompilerParams(
            dimension_semantics=dim_sems,
            vmem_limit_bytes=vmem_limit,
        ),
        cost_estimate=pl.CostEstimate(
            flops=2 * n,
            transcendentals=n,
            bytes_accessed=n * itemsize + ncores * 4,
        ),
    )(x2d)
    # TODO(synk): PyTorch returns the input dtype; we return f32 (matches ref).
    return jnp.sum(out) + tail_loss


def hloss_ref(x):
    xf = x.astype(jnp.float32)
    return -jnp.sum(xf * jnp.log(xf))


if __name__ == "__main__":
    key = jax.random.PRNGKey(0)

    # 1) Typical caller: positive softmax-like NCHW input, f32 (n % 128 == 0):
    #    single full block, pure-reshape (zero-copy) kernel input.
    B, C, H, W = 2, 4, 16, 16
    logits = jax.random.normal(key, (B, C, H, W), dtype=jnp.float32)
    x = jax.nn.softmax(logits, axis=1)
    out = jax.block_until_ready(hloss(x))
    ref = hloss_ref(x)
    assert jnp.allclose(out, ref, rtol=1e-5, atol=1e-5), (out, ref)

    # 2) Awkward size (n % 128 != 0): aligned prefix through Pallas (one full
    #    block + one masked partial block), <128-element tail in plain JAX.
    k2 = jax.random.PRNGKey(1)
    x2 = jax.random.uniform(k2, (3, 5, 7, 11), dtype=jnp.float32,
                            minval=0.1, maxval=1.0)
    out2 = jax.block_until_ready(hloss(x2))
    ref2 = hloss_ref(x2)
    assert jnp.allclose(out2, ref2, rtol=1e-5, atol=1e-5), (out2, ref2)

    # 3) bf16 input: bf16-native log on v6e/v7x, per-tile f32 upcast elsewhere;
    #    accumulation is always f32.
    x3 = x.astype(jnp.bfloat16)
    out3 = jax.block_until_ready(hloss(x3))
    ref3 = hloss_ref(x3)
    assert jnp.allclose(out3, ref3, rtol=1e-2, atol=1e-2), (out3, ref3)

    print("KERNEL_OK")
</pallas_src>

<mosaic_0001>
module attributes {stable_mosaic.version = 11 : i64} {
  func.func @_hloss_kernel(%arg0: i32, %arg1: i32, %arg2: memref<16x128xf32, #tpu.memory_space<vmem>>, %arg3: memref<1x1xf32, #tpu.memory_space<smem>>, %arg4: memref<8x128xf32, #tpu.memory_space<vmem>>) attributes {dimension_semantics = [#tpu.dimension_semantics<arbitrary>, #tpu.dimension_semantics<arbitrary>], iteration_bounds = array<i64: 1, 1>, scalar_prefetch = 0 : i64, scratch_operands = 1 : i64, tpu.core_type = #tpu.core_type<tc>, window_params = [{transform_indices = @transform_0, window_bounds = array<i64: 16, 128>}, {transform_indices = @transform_1, window_bounds = array<i64: 1, 1>}]} {
    %c1_i32 = arith.constant 1 : i32
    %0 = arith.muli %arg0, %c1_i32 : i32
    %1 = arith.addi %0, %arg1 : i32
    %c0_i32 = arith.constant 0 : i32
    %2 = arith.cmpi eq, %arg1, %c0_i32 : i32
    %3 = arith.extui %2 : i1 to i32
    %c0_i32_0 = arith.constant 0 : i32
    %4 = arith.cmpi ne, %3, %c0_i32_0 : i32
    scf.if %4 {
      %cst = arith.constant 0.000000e+00 : f32
      %11 = vector.broadcast %cst : f32 to vector<8x128xf32>
      %c0 = arith.constant 0 : index
      %c0_5 = arith.constant 0 : index
      %12 = vector.load %arg4[%c0, %c0_5] : memref<8x128xf32, #tpu.memory_space<vmem>>, vector<8x128xf32>
      tpu.vector_store %arg4[%c0, %c0_5], %11 {strides = array<i32>} : memref<8x128xf32, #tpu.memory_space<vmem>>, vector<8x128xf32>,
    } else {
    }
    %c1_i32_1 = arith.constant 1 : i32
    %5 = arith.cmpi slt, %1, %c1_i32_1 : i32
    %6 = arith.extui %5 : i1 to i32
    %c0_i32_2 = arith.constant 0 : i32
    %7 = arith.cmpi ne, %6, %c0_i32_2 : i32
    scf.if %7 {
      %c0 = arith.constant 0 : index
      %c0_5 = arith.constant 0 : index
      %11 = vector.load %arg2[%c0, %c0_5] : memref<16x128xf32, #tpu.memory_space<vmem>>, vector<16x128xf32>
      %12 = math.log %11 : vector<16x128xf32>
      %13 = arith.mulf %11, %12 : vector<16x128xf32>
      %c0_6 = arith.constant 0 : index
      %c0_7 = arith.constant 0 : index
      %14 = vector.load %arg4[%c0_6, %c0_7] : memref<8x128xf32, #tpu.memory_space<vmem>>, vector<8x128xf32>
      %15 = vector.shape_cast %13 : vector<16x128xf32> to vector<2x8x128xf32>
      %cst = arith.constant dense<0.000000e+00> : vector<8x128xf32>
      %16 = vector.multi_reduction <add>, %15, %cst [0] : vector<2x8x128xf32> to vector<8x128xf32>
      %17 = arith.addf %14, %16 : vector<8x128xf32>
      %c0_8 = arith.constant 0 : index
      %c0_9 = arith.constant 0 : index
      %18 = vector.load %arg4[%c0_8, %c0_9] : memref<8x128xf32, #tpu.memory_space<vmem>>, vector<8x128xf32>
      tpu.vector_store %arg4[%c0_8, %c0_9], %17 {strides = array<i32>} : memref<8x128xf32, #tpu.memory_space<vmem>>, vector<8x128xf32>,
    } else {
    }
    %c0_i32_3 = arith.constant 0 : i32
    %8 = arith.cmpi eq, %arg1, %c0_i32_3 : i32
    %9 = arith.extui %8 : i1 to i32
    %c0_i32_4 = arith.constant 0 : i32
    %10 = arith.cmpi ne, %9, %c0_i32_4 : i32
    scf.if %10 {
      %c0 = arith.constant 0 : index
      %c0_5 = arith.constant 0 : index
      %11 = vector.load %arg4[%c0, %c0_5] : memref<8x128xf32, #tpu.memory_space<vmem>>, vector<8x128xf32>
      %12 = vector.shape_cast %11 : vector<8x128xf32> to vector<1x8x128xf32>
      %cst = arith.constant dense<0.000000e+00> : vector<1xf32>
      %13 = vector.multi_reduction <add>, %12, %cst [1, 2] : vector<1x8x128xf32> to vector<1xf32>
      %14 = vector.shape_cast %13 : vector<1xf32> to vector<1x1x1xf32>
      %15 = vector.extract %14[0, 0, 0] : f32 from vector<1x1x1xf32>
      %cst_6 = arith.constant 0.000000e+00 : f32
      %16 = arith.subf %cst_6, %15 : f32
      %c0_7 = arith.constant 0 : index
      %c0_8 = arith.constant 0 : index
      %17 = memref.load %arg3[%c0_7, %c0_8] : memref<1x1xf32, #tpu.memory_space<smem>>
      memref.store %16, %arg3[%c0_7, %c0_8] : memref<1x1xf32, #tpu.memory_space<smem>>
    } else {
    }
    return
  }
  func.func @transform_0(%arg0: i32, %arg1: i32) -> (i32, i32) {
    %c1_i32 = arith.constant 1 : i32
    %0 = arith.muli %arg0, %c1_i32 : i32
    %1 = arith.addi %0, %arg1 : i32
    %c0_i32 = arith.constant 0 : i32
    %2 = arith.minsi %1, %c0_i32 : i32
    %c0_i32_0 = arith.constant 0 : i32
    %c0_i32_1 = arith.constant 0 : i32
    return %2, %c0_i32_0 : i32, i32
  }
  func.func @transform_1(%arg0: i32, %arg1: i32) -> (i32, i32) {
    %c0_i32 = arith.constant 0 : i32
    %c0_i32_0 = arith.constant 0 : i32
    return %arg0, %c0_i32 : i32, i32
  }
}

</mosaic_0001>

<llo_original>
// kernel: tpu_custom_call.1
$region0: #{tpu_custom_call.1}
  #allocation0 [shape = 'u32[]', space=smem, size = 0x4, offset = 0x4, fixed_abs, tag = 'smem constant byte address 0x4 - core index']
  #allocation1 [shape = 'u32[144,128]{1,0:T(1,128)}', space=vmem, size = 0x12000, scoped, tag = 'internal scratch']
  #allocation2 [shape = 'f32[8,128]{1,0:T(8,128)}', space=vmem, size = 0x1000, scoped, tag = 'scratch operand']
  %s0 = inlined_call_operand.hbm [shape: f32[16,128], index: 0, kind: input, shape index: {}]
  %s1 = inlined_call_operand.hbm [shape: f32[1,1], index: 1, kind: output, shape index: {}]
  %s2 = sld [smem:[#allocation0]]
  $region30: #{tpu_custom_call.1} parent=0
    _
  %s4 = ssub.s32 1, %s2
  %s5 = scalar_select 0, %s4, %s2
  $region1: #{tpu_custom_call.1} parent=0
    #allocation3 [shape = 'u8[8192]{0}', space=vmem, size = 0x2000, scoped, tag = 'input window, operand 0, single buffered']
    #allocation4 [shape = 's32[1]{0}', space=sflag, size = 0x4, scoped, tag = 'scoped memory for tpu_custom_call.1']
    #allocation5 [shape = 's32[1]{0}', space=sflag, size = 0x4, scoped, tag = 'scoped memory for tpu_custom_call.1']
    #allocation6 [shape = 'u8[512]{0}', space=smem, size = 0x200, scoped, tag = 'output window, operand 0, single buffered']
    %6 = vsyncpa [#allocation4], 0
    %7 = vsyncpa [#allocation5], 0
    // Predicated region
    $region2: #{tpu_custom_call.1} parent=1 // pred_check
      _
    $region3: #{tpu_custom_call.1} parent=1 // pred_check_branch
      %9 = sbr.rel (0) target = $region5
    $region4: #{tpu_custom_call.1} parent=1 // pred_region
      %s10 = sadd.s32 0, 0
      %p11 = scmp.lt.s32.totalorder %s10, 0
      %s12 = scalar_select %p11, %s10, 0
      %s13 = smul.u32 2, %s12
      %s15 = ssub.s32 256, 256
      %16 = vsyncadd [#allocation4], %s15
      %s17 = smul.addr %s13, 128
      %s18 = scalar_lea.hbm %s0, %s17
      %s19 = sshll.u32 [#allocation3], 4
      %s20 = int_to_ptr.vmem [resolvable:$true] %s19
      %25 = dma.hbm_to_vmem [thread:$0]  %s18, 256, %s20, [#allocation4], 128, 128, 8
    $region5: #{tpu_custom_call.1} parent=1 // pred_fallthru
      _
    // Predicated region
    $region6: #{tpu_custom_call.1} parent=1 // pred_check
      _
    $region7: #{tpu_custom_call.1} parent=1 // pred_check_branch
      %27 = sbr.rel (0) target = $region9
    $region8: #{tpu_custom_call.1} parent=1 // pred_region
      %28 = dma.done [#allocation4], 256
    $region9: #{tpu_custom_call.1} parent=1 // pred_fallthru
      _
    %s29 = sadd.s32 0, 0
    %p30 = scmp.lt.s32.totalorder %s29, 0
    %s31 = scalar_select %p30, %s29, 0
    %s32 = smul.u32 2, %s31
    %s33 = sadd.s32 0, 0
    %p34 = scmp.eq.s32.totalorder 0, 0
    // Predicated region
    $region10: #{tpu_custom_call.1} parent=1 // pred_check
      %p35 = pneg %p34
    $region11: #{tpu_custom_call.1} parent=1 // pred_check_branch
      %37 = sbr.rel (%p35) target = $region13
    $region12: #{tpu_custom_call.1} parent=1 // pred_region
      %38 = vst [vmem:[#allocation2] sm:$0xff] 0.0
    $region13: #{tpu_custom_call.1} parent=1 // pred_fallthru
      _
    %p39 = scmp.lt.s32.totalorder %s33, 1
    // Predicated region
    $region14: #{tpu_custom_call.1} parent=1 // pred_check
      %p40 = pneg %p39
    $region15: #{tpu_custom_call.1} parent=1 // pred_check_branch
      %42 = sbr.rel (%p40) target = $region17
    $region16: #{tpu_custom_call.1} parent=1 // pred_region
      %v43 = vld [vmem:[#allocation3] sm:$0xff]
      %v44 = vld [vmem:[#allocation3 + $0x8] sm:$0xff]
      %v45 = vlog2.pop %v43
      %v46 = vmul.f32 %v45, 0.6931472
      %v47 = vlog2.pop %v44
      %v48 = vmul.f32 %v47, 0.6931472
      %v49 = vmul.f32 %v43, %v46
      %v50 = vmul.f32 %v44, %v48
      %v51 = vld [vmem:[#allocation2] sm:$0xff]
      %v52 = vadd.f32 %v49, %v50
      %v53 = vadd.f32 %v51, %v52
      %54 = vst [vmem:[#allocation2] sm:$0xff] %v53
    $region17: #{tpu_custom_call.1} parent=1 // pred_fallthru
      _
    // Predicated region
    $region18: #{tpu_custom_call.1} parent=1 // pred_check
      %p55 = pneg %p34
    $region19: #{tpu_custom_call.1} parent=1 // pred_check_branch
      %57 = sbr.rel (%p55) target = $region21
    $region20: #{tpu_custom_call.1} parent=1 // pred_region
      %v58 = vld [vmem:[#allocation2] sm:$0xff]
      %59 = vadd.xlane.f32.xlu0 %v58
      %v60 = vpop.xlane.xlu0 %59
      %v61 = vrot.slane %v60, 4
      %v62 = vadd.f32 %v60, %v61
      %v63 = vrot.slane %v62, 2
      %v64 = vadd.f32 %v62, %v63
      %v65 = vrot.slane %v64, 1
      %v66 = vadd.f32 %v64, %v65
      %s67 = vtos %v66
      %s68 = ssub.f32 0.0, %s67
      %s69 = scalar_lea.smem [#allocation6], 0
      %70 = sst [smem:[%s69]] %s68
    $region21: #{tpu_custom_call.1} parent=1 // pred_fallthru
      _
    // Predicated region
    $region22: #{tpu_custom_call.1} parent=1 // pred_check
      _
    $region23: #{tpu_custom_call.1} parent=1 // pred_check_branch
      %72 = sbr.rel (0) target = $region25
    $region24: #{tpu_custom_call.1} parent=1 // pred_region
      %s74 = ssub.s32 16, 16
      %75 = vsyncadd [#allocation5], %s74
      %78 = dma.smem_to_hbm [#allocation6], 16, %s1, [#allocation5]
    $region25: #{tpu_custom_call.1} parent=1 // pred_fallthru
      _
    // Predicated region
    $region26: #{tpu_custom_call.1} parent=1 // pred_check
      _
    $region27: #{tpu_custom_call.1} parent=1 // pred_check_branch
      %80 = sbr.rel (0) target = $region29
    $region28: #{tpu_custom_call.1} parent=1 // pred_region
      %81 = dma.done [#allocation5], 16
    $region29: #{tpu_custom_call.1} parent=1 // pred_fallthru
      _
    %82 = sfence
    %83 = vsyncpa [#allocation4], 1
    %84 = vsyncpa [#allocation5], 1

</llo_original>
